<compile_context>
chip_gen: v6e
topology: v6e:2x2x1
jax: 0.10.0
libtpu: 0.0.40
codegen_flags: <defaults>
</compile_context>

<pallas_src>
import functools

import jax
import jax.numpy as jnp
from jax.experimental import pallas as pl
from jax.experimental.pallas import tpu as pltpu


# -----------------------------------------------------------------------------
# Fused Pallas kernel: one LSTM time step through ALL layers.
#   x_ref    : [1, D_pad]          layer-0 input (zero-padded to D_pad)
#   h_in_ref : [L, 1, H]           previous hidden states
#   c_in_ref : [L, 1, H]           previous cell states
#   w_ref    : [L, D_pad + H, 4H]  fused [W_ih^T ; W_hh^T], gate cols (i,f,o,g)
#   b_ref    : [L, 1, 4H]          combined bias (b_ih + b_hh), gate cols (i,f,o,g)
# Outputs:
#   h_out_ref: [L, 1, H]
#   c_out_ref: [L, 1, H]
# -----------------------------------------------------------------------------
def fused_lstm_kernel(x_ref, h_in_ref, c_in_ref, w_ref, b_ref,
                      h_out_ref, c_out_ref):
    num_layers = h_in_ref.shape[0]
    hidden = h_in_ref.shape[2]
    d_pad = x_ref.shape[1]

    layer_in = x_ref[...].astype(jnp.float32)                  # [1, D_pad]

    # Statically unrolled layer loop: the inter-layer carry (layer_in) never
    # leaves on-chip registers/VMEM; weights for layer l are a single fused
    # [D_pad+H, 4H] slab feeding one MXU matmul.
    for layer in range(num_layers):
        h_prev = h_in_ref[layer].astype(jnp.float32)            # [1, H]
        c_prev = c_in_ref[layer].astype(jnp.float32)            # [1, H]

        xh = jnp.concatenate([layer_in, h_prev], axis=1)        # [1, D_pad+H]
        gates = (jnp.dot(xh, w_ref[layer],
                         preferred_element_type=jnp.float32)
                 + b_ref[layer])                                # [1, 4H]

        # Gate columns were permuted at init to (i, f, o, g):
        # one sigmoid over the first 3H lanes, one tanh over the last H lanes.
        sig = jax.nn.sigmoid(gates[:, :3 * hidden])             # [1, 3H]
        i_g = sig[:, 0 * hidden:1 * hidden]
        f_g = sig[:, 1 * hidden:2 * hidden]
        o_g = sig[:, 2 * hidden:3 * hidden]
        g_g = jnp.tanh(gates[:, 3 * hidden:])                   # [1, H]

        c_new = f_g * c_prev + i_g * g_g
        h_new = o_g * jnp.tanh(c_new)

        h_out_ref[layer] = h_new.astype(h_out_ref.dtype)
        c_out_ref[layer] = c_new.astype(c_out_ref.dtype)

        if layer + 1 < num_layers:
            if d_pad == hidden:
                layer_in = h_new
            else:
                # Pad next layer's input back up to D_pad (weight rows beyond
                # H are zero for layers >= 1, so this is exact).
                layer_in = jnp.concatenate(
                    [h_new, jnp.zeros((1, d_pad - hidden), jnp.float32)],
                    axis=1)


def _vmem_spec():
    return pl.BlockSpec(memory_space=pltpu.MemorySpace.VMEM)


def fused_lstm_step(x_pad, hidden, cell, w_stack, b_stack):
    """x_pad:[1,D_pad]  hidden,cell:[L,1,H]  w_stack:[L,D_pad+H,4H]  b_stack:[L,1,4H]."""
    num_layers, _, hidden_size = hidden.shape
    h_out, c_out = pl.pallas_call(
        fused_lstm_kernel,
        out_shape=(jax.ShapeDtypeStruct((num_layers, 1, hidden_size), jnp.float32),
                   jax.ShapeDtypeStruct((num_layers, 1, hidden_size), jnp.float32)),
        in_specs=[_vmem_spec()] * 5,
        out_specs=(_vmem_spec(), _vmem_spec()),
    )(x_pad, hidden, cell, w_stack, b_stack)
    return h_out, c_out


# -----------------------------------------------------------------------------
# LSTMEncoder wrapper (plain-JAX glue around the single fused Pallas kernel).
# -----------------------------------------------------------------------------
class LSTMEncoderPallas:
    def __init__(self, embed_size, batch_size, hidden_size, num_layers,
                 drop_out_prob, key):
        assert batch_size == 1, "forward() does input.view(1, 1, -1) => batch=1"
        self.embed_size = embed_size
        self.batch_size = batch_size
        self.hidden_size = hidden_size
        self.num_layers = num_layers
        self.dropout = drop_out_prob  # unused (eval semantics)
        self.d_pad = max(embed_size, hidden_size)

        H = hidden_size
        bound = 1.0 / (H ** 0.5)

        # Column permutation: PyTorch gate order (i, f, g, o) -> (i, f, o, g)
        # so the kernel can apply sigmoid/tanh each exactly once.
        perm = jnp.concatenate([jnp.arange(0, 2 * H),
                                jnp.arange(3 * H, 4 * H),
                                jnp.arange(2 * H, 3 * H)])

        w_list, b_list = [], []
        self.ref_params = []   # un-permuted / un-padded params for the reference
        for layer in range(num_layers):
            d_in = embed_size if layer == 0 else H
            key, k1, k2, k3, k4 = jax.random.split(key, 5)
            # Deterministic init matching nn.LSTM's uniform(-1/sqrt(H), 1/sqrt(H)).
            w_ih = jax.random.uniform(k1, (4 * H, d_in), jnp.float32, -bound, bound)
            w_hh = jax.random.uniform(k2, (4 * H, H), jnp.float32, -bound, bound)
            b_ih = jax.random.uniform(k3, (4 * H,), jnp.float32, -bound, bound)
            b_hh = jax.random.uniform(k4, (4 * H,), jnp.float32, -bound, bound)

            w_ih_t = jnp.transpose(w_ih)                       # [d_in, 4H]
            w_hh_t = jnp.transpose(w_hh)                       # [H,    4H]
            b_comb = (b_ih + b_hh)[None, :]                    # [1,    4H]
            self.ref_params.append((w_ih_t, w_hh_t, b_comb))

            # Permute gate columns, pad input rows to D_pad, fuse the two mats.
            w_ih_p = w_ih_t[:, perm]
            w_hh_p = w_hh_t[:, perm]
            if self.d_pad > d_in:
                w_ih_p = jnp.pad(w_ih_p, ((0, self.d_pad - d_in), (0, 0)))
            w_cat = jnp.concatenate([w_ih_p, w_hh_p], axis=0)  # [D_pad+H, 4H]
            w_list.append(w_cat)
            b_list.append(b_comb[:, perm])

        self.w_stack = jnp.stack(w_list, axis=0)               # [L, D_pad+H, 4H]
        self.b_stack = jnp.stack(b_list, axis=0)               # [L, 1, 4H]

    def init_hidden_cell(self, key):
        k1, k2 = jax.random.split(key)
        shape = (self.num_layers, self.batch_size, self.hidden_size)
        return (jax.random.normal(k1, shape, jnp.float32),
                jax.random.normal(k2, shape, jnp.float32))

    @functools.partial(jax.jit, static_argnums=0)
    def forward(self, x, hidden, cell):
        # x: any shape with embed_size elements -> view(1, 1, embed_size)
        x_row = jnp.reshape(x, (1, self.embed_size)).astype(jnp.float32)
        if self.d_pad > self.embed_size:
            x_row = jnp.pad(x_row, ((0, 0), (0, self.d_pad - self.embed_size)))
        h_out, c_out = fused_lstm_step(x_row, hidden, cell,
                                       self.w_stack, self.b_stack)
        output = jnp.reshape(h_out[-1], (1, 1, self.hidden_size))  # [seq=1, b=1, H]
        return output, h_out, c_out


# -----------------------------------------------------------------------------
# Pure-JAX reference (PyTorch gate order, separate per-layer matmuls) for a
# correctness sanity check that is independent of the kernel's weight layout.
# -----------------------------------------------------------------------------
def reference_forward(model, x, hidden, cell):
    layer_in = jnp.reshape(x, (1, model.embed_size)).astype(jnp.float32)
    new_h, new_c = [], []
    H = model.hidden_size
    for layer in range(model.num_layers):
        w_ih_t, w_hh_t, b = model.ref_params[layer]
        h_prev, c_prev = hidden[layer], cell[layer]
        gates = layer_in @ w_ih_t + h_prev @ w_hh_t + b
        i_g = jax.nn.sigmoid(gates[:, 0 * H:1 * H])
        f_g = jax.nn.sigmoid(gates[:, 1 * H:2 * H])
        g_g = jnp.tanh(gates[:, 2 * H:3 * H])
        o_g = jax.nn.sigmoid(gates[:, 3 * H:4 * H])
        c_new = f_g * c_prev + i_g * g_g
        h_new = o_g * jnp.tanh(c_new)
        new_h.append(h_new)
        new_c.append(c_new)
        layer_in = h_new
    return (jnp.reshape(new_h[-1], (1, 1, H)),
            jnp.stack(new_h, 0), jnp.stack(new_c, 0))


if __name__ == "__main__":
    embed_size = 32
    batch_size = 1     # forced by input.view(1, 1, -1)
    hidden_size = 32
    num_layers = 2
    drop_out_prob = 0.1

    root = jax.random.PRNGKey(0)
    k_params, k_state, k_input = jax.random.split(root, 3)

    model = LSTMEncoderPallas(embed_size, batch_size, hidden_size,
                              num_layers, drop_out_prob, k_params)
    hidden, cell = model.init_hidden_cell(k_state)
    x = jax.random.normal(k_input, (embed_size,), jnp.float32)

    out, h_out, c_out = model.forward(x, hidden, cell)
    jax.block_until_ready((out, h_out, c_out))

    # Sanity check vs pure-JAX reference.
    ref_out, ref_h, ref_c = reference_forward(model, x, hidden, cell)
    assert jnp.allclose(out, ref_out, atol=1e-5)
    assert jnp.allclose(h_out, ref_h, atol=1e-5)
    assert jnp.allclose(c_out, ref_c, atol=1e-5)
    assert out.shape == (1, 1, hidden_size)
    assert h_out.shape == (num_layers, 1, hidden_size)
    assert c_out.shape == (num_layers, 1, hidden_size)

    print("KERNEL_OK")
</pallas_src>

<mosaic_0001>
module attributes {stable_mosaic.version = 11 : i64} {
  func.func @fused_lstm_kernel(%arg0: memref<1x32xf32, #tpu.memory_space<vmem>>, %arg1: memref<2x1x32xf32, #tpu.memory_space<vmem>>, %arg2: memref<2x1x32xf32, #tpu.memory_space<vmem>>, %arg3: memref<2x64x128xf32, #tpu.memory_space<vmem>>, %arg4: memref<2x1x128xf32, #tpu.memory_space<vmem>>, %arg5: memref<2x1x32xf32, #tpu.memory_space<vmem>>, %arg6: memref<2x1x32xf32, #tpu.memory_space<vmem>>) attributes {dimension_semantics = [], scalar_prefetch = 0 : i64, scratch_operands = 0 : i64, tpu.core_type = #tpu.core_type<tc>} {
    %c0 = arith.constant 0 : index
    %c0_0 = arith.constant 0 : index
    %0 = vector.load %arg0[%c0, %c0_0] : memref<1x32xf32, #tpu.memory_space<vmem>>, vector<1x32xf32>
    %c0_1 = arith.constant 0 : index
    %c0_2 = arith.constant 0 : index
    %c0_3 = arith.constant 0 : index
    %1 = vector.load %arg1[%c0_1, %c0_2, %c0_3] : memref<2x1x32xf32, #tpu.memory_space<vmem>>, vector<1x1x32xf32>
    %2 = vector.shape_cast %1 : vector<1x1x32xf32> to vector<1x32xf32>
    %c0_4 = arith.constant 0 : index
    %c0_5 = arith.constant 0 : index
    %c0_6 = arith.constant 0 : index
    %3 = vector.load %arg2[%c0_4, %c0_5, %c0_6] : memref<2x1x32xf32, #tpu.memory_space<vmem>>, vector<1x1x32xf32>
    %4 = vector.shape_cast %3 : vector<1x1x32xf32> to vector<1x32xf32>
    %5 = tpu.concatenate %0, %2 in 1 : vector<1x32xf32>, vector<1x32xf32> -> vector<1x64xf32>
    %c0_7 = arith.constant 0 : index
    %c0_8 = arith.constant 0 : index
    %c0_9 = arith.constant 0 : index
    %6 = vector.load %arg3[%c0_7, %c0_8, %c0_9] : memref<2x64x128xf32, #tpu.memory_space<vmem>>, vector<1x64x128xf32>
    %7 = vector.shape_cast %6 : vector<1x64x128xf32> to vector<64x128xf32>
    %cst = arith.constant dense<0.000000e+00> : vector<1x128xf32>
    %8 = tpu.matmul %5, %7, %cst {dimension_numbers = #tpu.dot_dimension_numbers<[1], [0], [0], [1], [0, 0, 1, 1], [], []>} : vector<1x64xf32>, vector<64x128xf32>, vector<1x128xf32> -> vector<1x128xf32>
    %c0_10 = arith.constant 0 : index
    %c0_11 = arith.constant 0 : index
    %c0_12 = arith.constant 0 : index
    %9 = vector.load %arg4[%c0_10, %c0_11, %c0_12] : memref<2x1x128xf32, #tpu.memory_space<vmem>>, vector<1x1x128xf32>
    %10 = vector.shape_cast %9 : vector<1x1x128xf32> to vector<1x128xf32>
    %11 = arith.addf %8, %10 : vector<1x128xf32>
    %12 = vector.extract_strided_slice %11 {offsets = [0, 0], sizes = [1, 96], strides = [1, 1]} : vector<1x128xf32> to vector<1x96xf32>
    %13 = arith.negf %12 : vector<1x96xf32>
    %14 = math.exp %13 : vector<1x96xf32>
    %cst_13 = arith.constant 1.000000e+00 : f32
    %15 = vector.broadcast %cst_13 : f32 to vector<1x96xf32>
    %16 = arith.addf %15, %14 : vector<1x96xf32>
    %17 = arith.divf %15, %16 : vector<1x96xf32>
    %18 = vector.extract_strided_slice %17 {offsets = [0, 0], sizes = [1, 32], strides = [1, 1]} : vector<1x96xf32> to vector<1x32xf32>
    %19 = vector.extract_strided_slice %17 {offsets = [0, 32], sizes = [1, 32], strides = [1, 1]} : vector<1x96xf32> to vector<1x32xf32>
    %20 = vector.extract_strided_slice %17 {offsets = [0, 64], sizes = [1, 32], strides = [1, 1]} : vector<1x96xf32> to vector<1x32xf32>
    %21 = vector.extract_strided_slice %11 {offsets = [0, 96], sizes = [1, 32], strides = [1, 1]} : vector<1x128xf32> to vector<1x32xf32>
    %22 = math.tanh %21 : vector<1x32xf32>
    %23 = arith.mulf %19, %4 : vector<1x32xf32>
    %24 = arith.mulf %18, %22 : vector<1x32xf32>
    %25 = arith.addf %23, %24 : vector<1x32xf32>
    %26 = math.tanh %25 : vector<1x32xf32>
    %27 = arith.mulf %20, %26 : vector<1x32xf32>
    %c0_14 = arith.constant 0 : index
    %c0_15 = arith.constant 0 : index
    %c0_16 = arith.constant 0 : index
    %28 = vector.load %arg5[%c0_14, %c0_15, %c0_16] : memref<2x1x32xf32, #tpu.memory_space<vmem>>, vector<1x1x32xf32>
    %29 = vector.shape_cast %28 : vector<1x1x32xf32> to vector<1x32xf32>
    %30 = vector.shape_cast %27 : vector<1x32xf32> to vector<1x1x32xf32>
    tpu.vector_store %arg5[%c0_14, %c0_15, %c0_16], %30 {strides = array<i32>} : memref<2x1x32xf32, #tpu.memory_space<vmem>>, vector<1x1x32xf32>,
    %c0_17 = arith.constant 0 : index
    %c0_18 = arith.constant 0 : index
    %c0_19 = arith.constant 0 : index
    %31 = vector.load %arg6[%c0_17, %c0_18, %c0_19] : memref<2x1x32xf32, #tpu.memory_space<vmem>>, vector<1x1x32xf32>
    %32 = vector.shape_cast %31 : vector<1x1x32xf32> to vector<1x32xf32>
    %33 = vector.shape_cast %25 : vector<1x32xf32> to vector<1x1x32xf32>
    tpu.vector_store %arg6[%c0_17, %c0_18, %c0_19], %33 {strides = array<i32>} : memref<2x1x32xf32, #tpu.memory_space<vmem>>, vector<1x1x32xf32>,
    %c1 = arith.constant 1 : index
    %c0_20 = arith.constant 0 : index
    %c0_21 = arith.constant 0 : index
    %34 = vector.load %arg1[%c1, %c0_20, %c0_21] : memref<2x1x32xf32, #tpu.memory_space<vmem>>, vector<1x1x32xf32>
    %35 = vector.shape_cast %34 : vector<1x1x32xf32> to vector<1x32xf32>
    %c1_22 = arith.constant 1 : index
    %c0_23 = arith.constant 0 : index
    %c0_24 = arith.constant 0 : index
    %36 = vector.load %arg2[%c1_22, %c0_23, %c0_24] : memref<2x1x32xf32, #tpu.memory_space<vmem>>, vector<1x1x32xf32>
    %37 = vector.shape_cast %36 : vector<1x1x32xf32> to vector<1x32xf32>
    %38 = tpu.concatenate %27, %35 in 1 : vector<1x32xf32>, vector<1x32xf32> -> vector<1x64xf32>
    %c1_25 = arith.constant 1 : index
    %c0_26 = arith.constant 0 : index
    %c0_27 = arith.constant 0 : index
    %39 = vector.load %arg3[%c1_25, %c0_26, %c0_27] : memref<2x64x128xf32, #tpu.memory_space<vmem>>, vector<1x64x128xf32>
    %40 = vector.shape_cast %39 : vector<1x64x128xf32> to vector<64x128xf32>
    %cst_28 = arith.constant dense<0.000000e+00> : vector<1x128xf32>
    %41 = tpu.matmul %38, %40, %cst_28 {dimension_numbers = #tpu.dot_dimension_numbers<[1], [0], [0], [1], [0, 0, 1, 1], [], []>} : vector<1x64xf32>, vector<64x128xf32>, vector<1x128xf32> -> vector<1x128xf32>
    %c1_29 = arith.constant 1 : index
    %c0_30 = arith.constant 0 : index
    %c0_31 = arith.constant 0 : index
    %42 = vector.load %arg4[%c1_29, %c0_30, %c0_31] : memref<2x1x128xf32, #tpu.memory_space<vmem>>, vector<1x1x128xf32>
    %43 = vector.shape_cast %42 : vector<1x1x128xf32> to vector<1x128xf32>
    %44 = arith.addf %41, %43 : vector<1x128xf32>
    %45 = vector.extract_strided_slice %44 {offsets = [0, 0], sizes = [1, 96], strides = [1, 1]} : vector<1x128xf32> to vector<1x96xf32>
    %46 = arith.negf %45 : vector<1x96xf32>
    %47 = math.exp %46 : vector<1x96xf32>
    %cst_32 = arith.constant 1.000000e+00 : f32
    %48 = vector.broadcast %cst_32 : f32 to vector<1x96xf32>
    %49 = arith.addf %48, %47 : vector<1x96xf32>
    %50 = arith.divf %48, %49 : vector<1x96xf32>
    %51 = vector.extract_strided_slice %50 {offsets = [0, 0], sizes = [1, 32], strides = [1, 1]} : vector<1x96xf32> to vector<1x32xf32>
    %52 = vector.extract_strided_slice %50 {offsets = [0, 32], sizes = [1, 32], strides = [1, 1]} : vector<1x96xf32> to vector<1x32xf32>
    %53 = vector.extract_strided_slice %50 {offsets = [0, 64], sizes = [1, 32], strides = [1, 1]} : vector<1x96xf32> to vector<1x32xf32>
    %54 = vector.extract_strided_slice %44 {offsets = [0, 96], sizes = [1, 32], strides = [1, 1]} : vector<1x128xf32> to vector<1x32xf32>
    %55 = math.tanh %54 : vector<1x32xf32>
    %56 = arith.mulf %52, %37 : vector<1x32xf32>
    %57 = arith.mulf %51, %55 : vector<1x32xf32>
    %58 = arith.addf %56, %57 : vector<1x32xf32>
    %59 = math.tanh %58 : vector<1x32xf32>
    %60 = arith.mulf %53, %59 : vector<1x32xf32>
    %c1_33 = arith.constant 1 : index
    %c0_34 = arith.constant 0 : index
    %c0_35 = arith.constant 0 : index
    %61 = vector.load %arg5[%c1_33, %c0_34, %c0_35] : memref<2x1x32xf32, #tpu.memory_space<vmem>>, vector<1x1x32xf32>
    %62 = vector.shape_cast %61 : vector<1x1x32xf32> to vector<1x32xf32>
    %63 = vector.shape_cast %60 : vector<1x32xf32> to vector<1x1x32xf32>
    tpu.vector_store %arg5[%c1_33, %c0_34, %c0_35], %63 {strides = array<i32>} : memref<2x1x32xf32, #tpu.memory_space<vmem>>, vector<1x1x32xf32>,
    %c1_36 = arith.constant 1 : index
    %c0_37 = arith.constant 0 : index
    %c0_38 = arith.constant 0 : index
    %64 = vector.load %arg6[%c1_36, %c0_37, %c0_38] : memref<2x1x32xf32, #tpu.memory_space<vmem>>, vector<1x1x32xf32>
    %65 = vector.shape_cast %64 : vector<1x1x32xf32> to vector<1x32xf32>
    %66 = vector.shape_cast %58 : vector<1x32xf32> to vector<1x1x32xf32>
    tpu.vector_store %arg6[%c1_36, %c0_37, %c0_38], %66 {strides = array<i32>} : memref<2x1x32xf32, #tpu.memory_space<vmem>>, vector<1x1x32xf32>,
    return
  }
}

</mosaic_0001>

<llo_original>
// kernel: forward.1
$region0: #{forward.1}
  #allocation0 [shape = 'u32[]', space=smem, size = 0x4, offset = 0x4, fixed_abs, tag = 'smem constant byte address 0x4 - core index']
  #allocation1 [shape = 'u32[144,128]{1,0:T(1,128)}', space=vmem, size = 0x12000, scoped, tag = 'internal scratch']
  %s0 = inlined_call_operand.vmem [shape: f32[1,32], index: 0, kind: input, shape index: {}]
  %s1 = inlined_call_operand.vmem [shape: f32[2,1,32], index: 1, kind: input, shape index: {}]
  %s2 = inlined_call_operand.vmem [shape: f32[2,1,32], index: 2, kind: input, shape index: {}]
  %s3 = inlined_call_operand.hbm [shape: f32[2,64,128], index: 3, kind: input, shape index: {}]
  %s4 = inlined_call_operand.vmem [shape: f32[2,1,128], index: 4, kind: input, shape index: {}]
  %s5 = inlined_call_operand.vmem [shape: f32[2,1,32], index: 5, kind: output, shape index: {0}]
  %s6 = inlined_call_operand.hbm [shape: f32[2,1,32], index: 6, kind: output, shape index: {1}]
  %7 = xla_tuple %s5, %s6
  %s8 = sld [smem:[#allocation0]]
  $region42: #{forward.1} parent=0
    _
  %s10 = ssub.s32 1, %s8
  %s11 = scalar_select 0, %s10, %s8
  $region1: #{forward.1} parent=0
    #allocation2 [shape = 'u8[65536]{0}', space=vmem, size = 0x10000, scoped, tag = 'input window, operand 3, single buffered']
    #allocation3 [shape = 's32[1]{0}', space=sflag, size = 0x4, scoped, tag = 'scoped memory for forward.1']
    #allocation4 [shape = 's32[1]{0}', space=sflag, size = 0x4, scoped, tag = 'scoped memory for forward.1']
    #allocation5 [shape = 'u8[1024]{0}', space=vmem, size = 0x400, scoped, tag = 'output window, operand 1, single buffered']
    %12 = vsyncpa [#allocation3], 0
    %13 = vsyncpa [#allocation4], 0
    // Predicated region
    $region2: #{forward.1} parent=1 // pred_check
      _
    $region3: #{forward.1} parent=1 // pred_check_branch
      %15 = sbr.rel (0) target = $region5
    $region4: #{forward.1} parent=1 // pred_region
      _
    $region5: #{forward.1} parent=1 // pred_fallthru
      _
    // Predicated region
    $region6: #{forward.1} parent=1 // pred_check
      _
    $region7: #{forward.1} parent=1 // pred_check_branch
      %17 = sbr.rel (0) target = $region9
    $region8: #{forward.1} parent=1 // pred_region
      _
    $region9: #{forward.1} parent=1 // pred_fallthru
      _
    // Predicated region
    $region10: #{forward.1} parent=1 // pred_check
      _
    $region11: #{forward.1} parent=1 // pred_check_branch
      %19 = sbr.rel (0) target = $region13
    $region12: #{forward.1} parent=1 // pred_region
      _
    $region13: #{forward.1} parent=1 // pred_fallthru
      _
    // Predicated region
    $region14: #{forward.1} parent=1 // pred_check
      _
    $region15: #{forward.1} parent=1 // pred_check_branch
      %21 = sbr.rel (0) target = $region17
    $region16: #{forward.1} parent=1 // pred_region
      %s23 = ssub.s32 2048, 2048
      %24 = vsyncadd [#allocation3], %s23
      %s25 = sshll.u32 [#allocation2], 4
      %s26 = int_to_ptr.vmem [resolvable:$true] %s25
      %31 = dma.hbm_to_vmem [thread:$0]  %s3, 2048, %s26, [#allocation3], 128, 128, 8
    $region17: #{forward.1} parent=1 // pred_fallthru
      _
    // Predicated region
    $region18: #{forward.1} parent=1 // pred_check
      _
    $region19: #{forward.1} parent=1 // pred_check_branch
      %33 = sbr.rel (0) target = $region21
    $region20: #{forward.1} parent=1 // pred_region
      _
    $region21: #{forward.1} parent=1 // pred_fallthru
      _
    // Predicated region
    $region22: #{forward.1} parent=1 // pred_check
      _
    $region23: #{forward.1} parent=1 // pred_check_branch
      %35 = sbr.rel (0) target = $region25
    $region24: #{forward.1} parent=1 // pred_region
      %36 = dma.done [#allocation3], 2048
    $region25: #{forward.1} parent=1 // pred_fallthru
      _
    %v37 = vld [vmem:[%s0] sm:$0x1]
    %v38 = vld [vmem:[%s1] sm:$0x1]
    %v39 = vld [vmem:[%s2] sm:$0x1]
    %v41 = vlaneseq
    %v42 = vshrl.u32 %v41, 7
    %v43 = vsub.s32 0, %v42
    %v44 = vrot.slane %v38, %v43
    %45 = vrot.lane.b32.xlu0 %v44, 32
    %v46 = vpop.permute.xlu0 %45
    %vm48 = vcmask 261120
    %v49 = vsel %vm48, %v37, %v46
    %v50 = vld [vmem:[#allocation2] sm:$0xff]
    %v51 = vld [vmem:[#allocation2 + $0x8] sm:$0xff]
    %v52 = vld [vmem:[#allocation2 + $0x10] sm:$0xff]
    %v53 = vld [vmem:[#allocation2 + $0x18] sm:$0xff]
    %v54 = vld [vmem:[#allocation2 + $0x20] sm:$0xff]
    %v55 = vld [vmem:[#allocation2 + $0x28] sm:$0xff]
    %v56 = vld [vmem:[#allocation2 + $0x30] sm:$0xff]
    %v57 = vld [vmem:[#allocation2 + $0x38] sm:$0xff]
    %v58 = vld [vmem:[%s4] sm:$0x1]
    %vm59 = vcmask 523264
    %v61 = vsel %vm59, %v49, 0
    %63 = vmatprep.subr.mxu0 0.0
    %64 = vmatpush1.msra.mxu0 0.0
    %65 = vmatprep.subr.mxu0 0.0
    %66 = vmatpush1.msra.mxu0 0.0
    %67 = vmatprep.subr.mxu0 0.0
    %68 = vmatpush1.msra.mxu0 0.0
    %69 = vmatprep.subr.mxu0 0.0
    %70 = vmatpush1.msra.mxu0 0.0
    %71 = vmatprep.subr.mxu0 0.0
    %72 = vmatpush1.msra.mxu0 0.0
    %73 = vmatprep.subr.mxu0 0.0
    %74 = vmatpush1.msra.mxu0 0.0
    %75 = vmatprep.subr.mxu0 0.0
    %76 = vmatpush1.msra.mxu0 0.0
    %77 = vmatprep.subr.mxu0 0.0
    %78 = vmatpush1.msra.mxu0 0.0
    %79 = vmatprep.subr.mxu0 0.0
    %80 = vmatpush1.msra.mxu0 %v57
    %81 = vmatprep.subr.mxu0 0.0
    %82 = vmatpush1.msra.mxu0 %v56
    %83 = vmatprep.subr.mxu0 0.0
    %84 = vmatpush1.msra.mxu0 %v55
    %85 = vmatprep.subr.mxu0 0.0
    %86 = vmatpush1.msra.mxu0 %v54
    %87 = vmatprep.subr.mxu0 0.0
    %88 = vmatpush1.msra.mxu0 %v53
    %89 = vmatprep.subr.mxu0 0.0
    %90 = vmatpush1.msra.mxu0 %v52
    %91 = vmatprep.subr.mxu0 0.0
    %92 = vmatpush1.msra.mxu0 %v51
    %93 = vmatprep.subr.mxu0 0.0
    %94 = vmatpush1.msra.mxu0 %v50
    %95 = vmatprep.subr.mxu0 0.0
    %96 = vmatpush2.msra.mxu0 0.0
    %97 = vmatprep.subr.mxu0 0.0
    %98 = vmatpush2.msra.mxu0 0.0
    %99 = vmatprep.subr.mxu0 0.0
    %100 = vmatpush2.msra.mxu0 0.0
    %101 = vmatprep.subr.mxu0 0.0
    %102 = vmatpush2.msra.mxu0 0.0
    %103 = vmatprep.subr.mxu0 0.0
    %104 = vmatpush2.msra.mxu0 0.0
    %105 = vmatprep.subr.mxu0 0.0
    %106 = vmatpush2.msra.mxu0 0.0
    %107 = vmatprep.subr.mxu0 0.0
    %108 = vmatpush2.msra.mxu0 0.0
    %109 = vmatprep.subr.mxu0 0.0
    %110 = vmatpush2.msra.mxu0 0.0
    %111 = vmatprep.subr.mxu0 0.0
    %112 = vmatpush2.msra.mxu0 0.0
    %113 = vmatprep.subr.mxu0 0.0
    %114 = vmatpush2.msra.mxu0 0.0
    %115 = vmatprep.subr.mxu0 0.0
    %116 = vmatpush2.msra.mxu0 0.0
    %117 = vmatprep.subr.mxu0 0.0
    %118 = vmatpush2.msra.mxu0 0.0
    %119 = vmatprep.subr.mxu0 0.0
    %120 = vmatpush2.msra.mxu0 0.0
    %121 = vmatprep.subr.mxu0 0.0
    %122 = vmatpush2.msra.mxu0 0.0
    %123 = vmatprep.subr.mxu0 0.0
    %124 = vmatpush2.msra.mxu0 0.0
    %125 = vmatprep.subr.mxu0 0.0
    %126 = vmatpush2.msra.mxu0 0.0
    %127 = vmatprep.mubr.f32.mxu0 0.0
    %128 = vmatmul.mubr.f32.gmra.mxu0 %v61
    %v129 = vpop.f32.mrf.mxu0
    %v130 = vadd.f32 %v58, %v129
    %v131 = vpop.f32.mrf.mxu0
    %132 = vdwg.mxu0
    %v133 = vxor.u32 %v130, 2147483648
    %v134 = vmul.f32 %v133, 1.442695
    %v135 = vpow.pop %v134
    %v136 = vadd.f32 %v135, 1.0
    %v137 = vrcp.pop %v136
    %v138 = vmul.f32 1.0, %v137
    %v139 = vtanh.pop %v130
    %v141 = vlaneseq
    %v142 = vshrl.u32 %v141, 7
    %v143 = vsub.s32 0, %v142
    %v144 = vrot.slane %v39, %v143
    %145 = vrot.lane.b32.xlu0 %v144, 32
    %v146 = vpop.permute.xlu0 %145
    %v148 = vmul.f32 %v138, %v146
    %150 = vrot.lane.b32.xlu0 %v139, 32
    %v151 = vpop.permute.xlu0 %150
    %v153 = vmul.f32 %v138, %v151
    %155 = vrot.lane.b32.xlu0 %v153, 32
    %v156 = vpop.permute.xlu0 %155
    %v158 = vadd.f32 %v148, %v156
    %v159 = vtanh.pop %v158
    %161 = vrot.lane.b32.xlu0 %v159, 32
    %v162 = vpop.permute.xlu0 %161
    %v164 = vmul.f32 %v138, %v162
    %166 = vrot.lane.b32.xlu0 %v164, 64
    %v167 = vpop.permute.xlu0 %166
    %vm169 = vcmask 253952
    %170 = vst.msk [vmem:[%s5] sm:$0x1] %vm169, %v167
    %172 = vrot.lane.b32.xlu0 %v158, 96
    %v173 = vpop.permute.xlu0 %172
    %175 = vst.msk [vmem:[#allocation5] sm:$0x1] %vm169, %v173
    %s176 = scalar_lea.vmem %s1, 1
    %v177 = vld [vmem:[%s176] sm:$0x1]
    %s178 = scalar_lea.vmem %s2, 1
    %v179 = vld [vmem:[%s178] sm:$0x1]
    %v181 = vlaneseq
    %v182 = vshrl.u32 %v181, 7
    %v183 = vsub.s32 0, %v182
    %v184 = vrot.slane %v177, %v183
    %185 = vrot.lane.b32.xlu0 %v184, 32
    %v186 = vpop.permute.xlu0 %185
    %v188 = vsel %vm48, %v167, %v186
    %s189 = scalar_lea.vmem [#allocation2], 64
    %v190 = vld [vmem:[%s189] sm:$0xff]
    %v191 = vld [vmem:[%s189 + $0x8] sm:$0xff]
    %v192 = vld [vmem:[%s189 + $0x10] sm:$0xff]
    %v193 = vld [vmem:[%s189 + $0x18] sm:$0xff]
    %v194 = vld [vmem:[%s189 + $0x20] sm:$0xff]
    %v195 = vld [vmem:[%s189 + $0x28] sm:$0xff]
    %v196 = vld [vmem:[%s189 + $0x30] sm:$0xff]
    %v197 = vld [vmem:[%s189 + $0x38] sm:$0xff]
    %s198 = scalar_lea.vmem %s4, 1
    %v199 = vld [vmem:[%s198] sm:$0x1]
    %v201 = vsel %vm59, %v188, 0
    %203 = vmatprep.subr.mxu0 0.0
    %204 = vmatpush1.msra.mxu0 0.0
    %205 = vmatprep.subr.mxu0 0.0
    %206 = vmatpush1.msra.mxu0 0.0
    %207 = vmatprep.subr.mxu0 0.0
    %208 = vmatpush1.msra.mxu0 0.0
    %209 = vmatprep.subr.mxu0 0.0
    %210 = vmatpush1.msra.mxu0 0.0
    %211 = vmatprep.subr.mxu0 0.0
    %212 = vmatpush1.msra.mxu0 0.0
    %213 = vmatprep.subr.mxu0 0.0
    %214 = vmatpush1.msra.mxu0 0.0
    %215 = vmatprep.subr.mxu0 0.0
    %216 = vmatpush1.msra.mxu0 0.0
    %217 = vmatprep.subr.mxu0 0.0
    %218 = vmatpush1.msra.mxu0 0.0
    %219 = vmatprep.subr.mxu0 0.0
    %220 = vmatpush1.msra.mxu0 %v197
    %221 = vmatprep.subr.mxu0 0.0
    %222 = vmatpush1.msra.mxu0 %v196
    %223 = vmatprep.subr.mxu0 0.0
    %224 = vmatpush1.msra.mxu0 %v195
    %225 = vmatprep.subr.mxu0 0.0
    %226 = vmatpush1.msra.mxu0 %v194
    %227 = vmatprep.subr.mxu0 0.0
    %228 = vmatpush1.msra.mxu0 %v193
    %229 = vmatprep.subr.mxu0 0.0
    %230 = vmatpush1.msra.mxu0 %v192
    %231 = vmatprep.subr.mxu0 0.0
    %232 = vmatpush1.msra.mxu0 %v191
    %233 = vmatprep.subr.mxu0 0.0
    %234 = vmatpush1.msra.mxu0 %v190
    %235 = vmatprep.subr.mxu0 0.0
    %236 = vmatpush2.msra.mxu0 0.0
    %237 = vmatprep.subr.mxu0 0.0
    %238 = vmatpush2.msra.mxu0 0.0
    %239 = vmatprep.subr.mxu0 0.0
    %240 = vmatpush2.msra.mxu0 0.0
    %241 = vmatprep.subr.mxu0 0.0
    %242 = vmatpush2.msra.mxu0 0.0
    %243 = vmatprep.subr.mxu0 0.0
    %244 = vmatpush2.msra.mxu0 0.0
    %245 = vmatprep.subr.mxu0 0.0
    %246 = vmatpush2.msra.mxu0 0.0
    %247 = vmatprep.subr.mxu0 0.0
    %248 = vmatpush2.msra.mxu0 0.0
    %249 = vmatprep.subr.mxu0 0.0
    %250 = vmatpush2.msra.mxu0 0.0
    %251 = vmatprep.subr.mxu0 0.0
    %252 = vmatpush2.msra.mxu0 0.0
    %253 = vmatprep.subr.mxu0 0.0
    %254 = vmatpush2.msra.mxu0 0.0
    %255 = vmatprep.subr.mxu0 0.0
    %256 = vmatpush2.msra.mxu0 0.0
    %257 = vmatprep.subr.mxu0 0.0
    %258 = vmatpush2.msra.mxu0 0.0
    %259 = vmatprep.subr.mxu0 0.0
    %260 = vmatpush2.msra.mxu0 0.0
    %261 = vmatprep.subr.mxu0 0.0
    %262 = vmatpush2.msra.mxu0 0.0
    %263 = vmatprep.subr.mxu0 0.0
    %264 = vmatpush2.msra.mxu0 0.0
    %265 = vmatprep.subr.mxu0 0.0
    %266 = vmatpush2.msra.mxu0 0.0
    %267 = vmatprep.mubr.f32.mxu0 0.0
    %268 = vmatmul.mubr.f32.gmra.mxu0 %v201
    %v269 = vpop.f32.mrf.mxu0
    %v270 = vadd.f32 %v199, %v269
    %v271 = vpop.f32.mrf.mxu0
    %272 = vdwg.mxu0
    %v273 = vxor.u32 %v270, 2147483648
    %v274 = vmul.f32 %v273, 1.442695
    %v275 = vpow.pop %v274
    %v276 = vadd.f32 %v275, 1.0
    %v277 = vrcp.pop %v276
    %v278 = vmul.f32 1.0, %v277
    %v279 = vtanh.pop %v270
    %v281 = vlaneseq
    %v282 = vshrl.u32 %v281, 7
    %v283 = vsub.s32 0, %v282
    %v284 = vrot.slane %v179, %v283
    %285 = vrot.lane.b32.xlu0 %v284, 32
    %v286 = vpop.permute.xlu0 %285
    %v288 = vmul.f32 %v278, %v286
    %290 = vrot.lane.b32.xlu0 %v279, 32
    %v291 = vpop.permute.xlu0 %290
    %v293 = vmul.f32 %v278, %v291
    %295 = vrot.lane.b32.xlu0 %v293, 32
    %v296 = vpop.permute.xlu0 %295
    %v298 = vadd.f32 %v288, %v296
    %v299 = vtanh.pop %v298
    %301 = vrot.lane.b32.xlu0 %v299, 32
    %v302 = vpop.permute.xlu0 %301
    %v304 = vmul.f32 %v278, %v302
    %306 = vrot.lane.b32.xlu0 %v304, 64
    %v307 = vpop.permute.xlu0 %306
    %s309 = scalar_lea.vmem %s5, 1
    %310 = vst.msk [vmem:[%s309] sm:$0x1] %vm169, %v307
    %312 = vrot.lane.b32.xlu0 %v298, 96
    %v313 = vpop.permute.xlu0 %312
    %s315 = scalar_lea.vmem [#allocation5], 1
    %316 = vst.msk [vmem:[%s315] sm:$0x1] %vm169, %v313
    // Predicated region
    $region26: #{forward.1} parent=1 // pred_check
      _
    $region27: #{forward.1} parent=1 // pred_check_branch
      %318 = sbr.rel (0) target = $region29
    $region28: #{forward.1} parent=1 // pred_region
      _
    $region29: #{forward.1} parent=1 // pred_fallthru
      _
    // Predicated region
    $region30: #{forward.1} parent=1 // pred_check
      _
    $region31: #{forward.1} parent=1 // pred_check_branch
      %320 = sbr.rel (0) target = $region33
    $region32: #{forward.1} parent=1 // pred_region
      %s322 = ssub.s32 32, 32
      %323 = vsyncadd [#allocation4], %s322
      %s324 = sshll.u32 [#allocation5], 4
      %s325 = int_to_ptr.vmem [resolvable:$true] %s324
      %330 = dma.vmem_to_hbm [thread:$0]  %s325, 32, %s6, [#allocation4], 16, 16, 1
    $region33: #{forward.1} parent=1 // pred_fallthru
      _
    // Predicated region
    $region34: #{forward.1} parent=1 // pred_check
      _
    $region35: #{forward.1} parent=1 // pred_check_branch
      %332 = sbr.rel (0) target = $region37
    $region36: #{forward.1} parent=1 // pred_region
      _
    $region37: #{forward.1} parent=1 // pred_fallthru
      _
    // Predicated region
    $region38: #{forward.1} parent=1 // pred_check
      _
    $region39: #{forward.1} parent=1 // pred_check_branch
      %334 = sbr.rel (0) target = $region41
    $region40: #{forward.1} parent=1 // pred_region
      %335 = dma.done [#allocation4], 32
    $region41: #{forward.1} parent=1 // pred_fallthru
      _
    %336 = vsyncpa [#allocation3], 1
    %337 = vsyncpa [#allocation4], 1

</llo_original>
